<compile_context>
chip_gen: v6e
topology: v6e:2x2x1
jax: 0.10.0
libtpu: 0.0.40
codegen_flags: <defaults>
</compile_context>

<pallas_src>
import functools

import jax
import jax.numpy as jnp
from jax.experimental import pallas as pl
from jax.experimental.pallas import tpu as pltpu


def _clstm_kernel(patch_ref, w_ref, c_ref, h_out_ref, c_out_ref):
    """Fused conv (single im2col matmul, bias folded in) + LSTM gating.

    patch_ref : (K2Cp, N*HW)  im2col patches + ones row + zero pad, lane-dense
    w_ref     : (4*Ch, K2Cp)  conv weight (OIHW flattened) | bias col | zeros
    c_ref     : (Ch, N*HW)    previous cell state, batch folded into lanes
    h_out_ref : (Ch, N*HW)
    c_out_ref : (Ch, N*HW)
    """
    ch = c_ref.shape[0]

    # Single MXU matmul; K = k*k*(Cin+Ch)+1 (bias) padded to a multiple of 8.
    a = jnp.dot(w_ref[...], patch_ref[...], preferred_element_type=jnp.float32)

    # Gate rows: [0:Ch)=i, [Ch:2Ch)=f, [2Ch:3Ch)=o, [3Ch:4Ch)=g
    # (same order as torch.split along the conv output-channel axis).
    ifo = jax.nn.sigmoid(a[: 3 * ch])      # one fused EUP pass over i|f|o
    g = jnp.tanh(a[3 * ch:])

    i = ifo[:ch]
    f = ifo[ch:2 * ch]
    o = ifo[2 * ch:]

    c_prev = c_ref[...].astype(jnp.float32)
    c_new = c_prev * f + i * g
    h_new = o * jnp.tanh(c_new)

    h_out_ref[...] = h_new.astype(h_out_ref.dtype)
    c_out_ref[...] = c_new.astype(c_out_ref.dtype)


@functools.partial(jax.jit, static_argnames=("kernel_size", "use_bf16_matmul"))
def clstm_cell(x, h, c, weight_oihw, bias, *, kernel_size,
               use_bf16_matmul=False):
    """Forward pass of CLSTMCell.

    x : (N, Cin, H, W)   NCHW (PyTorch layout)
    h : (N, Ch,  H, W)
    c : (N, Ch,  H, W)
    weight_oihw : (4*Ch, Cin+Ch, k, k)   nn.Conv2d weight layout
    bias        : (4*Ch,)
    returns (h_new, c_new) in NCHW.
    """
    N, cin_x, H, W = x.shape
    ch = h.shape[1]
    assert ch % 2 == 0
    k = kernel_size
    pad = (k - 1) // 2
    cin = cin_x + ch
    HW = H * W
    NHW = N * HW
    K2C = cin * k * k
    # bias row + pad contraction depth up to a sublane multiple of 8
    K2Cp = ((K2C + 1 + 7) // 8) * 8
    n_zero_rows = K2Cp - K2C - 1

    mm_dtype = jnp.bfloat16 if use_bf16_matmul else x.dtype

    # ---- wrapper prep: pure data movement / cheap XLA ops -------------------
    combined = jnp.concatenate([x, h], axis=1)                       # (N, cin, H, W)
    padded = jnp.pad(combined, ((0, 0), (0, 0), (pad, pad), (pad, pad)))

    # Exact im2col: row order (channel-major, then ky, kx) matches
    # weight_oihw.reshape(4*Ch, cin*k*k).  Load-bearing: do not reorder.
    taps = [padded[:, :, ky:ky + H, kx:kx + W]
            for ky in range(k) for kx in range(k)]                   # each (N, cin, H, W)
    patches = jnp.stack(taps, axis=2)                                # (N, cin, k*k, H, W)
    patches = patches.transpose(1, 2, 0, 3, 4).reshape(K2C, NHW)     # batch -> lanes

    rows = [patches.astype(mm_dtype), jnp.ones((1, NHW), mm_dtype)]
    if n_zero_rows > 0:
        rows.append(jnp.zeros((n_zero_rows, NHW), mm_dtype))
    patches_aug = jnp.concatenate(rows, axis=0)                      # (K2Cp, NHW)

    w2d = weight_oihw.reshape(4 * ch, K2C)                           # contiguous reshape
    cols = [w2d.astype(mm_dtype), bias.reshape(4 * ch, 1).astype(mm_dtype)]
    if n_zero_rows > 0:
        cols.append(jnp.zeros((4 * ch, n_zero_rows), mm_dtype))
    w_aug = jnp.concatenate(cols, axis=1)                            # (4*Ch, K2Cp)

    c2d = c.transpose(1, 0, 2, 3).reshape(ch, NHW)                   # batch -> lanes

    h_new, c_new = pl.pallas_call(
        _clstm_kernel,
        out_shape=(
            jax.ShapeDtypeStruct((ch, NHW), x.dtype),
            jax.ShapeDtypeStruct((ch, NHW), x.dtype),
        ),
        grid_spec=pltpu.PrefetchScalarGridSpec(
            num_scalar_prefetch=0,
            grid=(1,),
            in_specs=[
                pl.BlockSpec((K2Cp, NHW), lambda i: (0, 0)),
                pl.BlockSpec((4 * ch, K2Cp), lambda i: (0, 0)),
                pl.BlockSpec((ch, NHW), lambda i: (0, 0)),
            ],
            out_specs=[
                pl.BlockSpec((ch, NHW), lambda i: (0, 0)),
                pl.BlockSpec((ch, NHW), lambda i: (0, 0)),
            ],
        ),
        # Donate the (jit-internal) c2d temp buffer to the c output.
        input_output_aliases={2: 1},
        compiler_params=pltpu.CompilerParams(
            dimension_semantics=("arbitrary",)),
    )(patches_aug, w_aug, c2d)

    # (Ch, N*HW) -> (N, Ch, H, W)
    h_new = h_new.reshape(ch, N, H, W).transpose(1, 0, 2, 3)
    c_new = c_new.reshape(ch, N, H, W).transpose(1, 0, 2, 3)
    return h_new, c_new


def clstm_cell_reference(x, h, c, weight_oihw, bias):
    """Pure-JAX reference (mirrors the PyTorch forward) for verification."""
    combined = jnp.concatenate([x, h], axis=1)
    A = jax.lax.conv_general_dilated(
        combined, weight_oihw, window_strides=(1, 1), padding="SAME",
        dimension_numbers=("NCHW", "OIHW", "NCHW"),
    ) + bias[None, :, None, None]
    ch = h.shape[1]
    Ai, Af, Ao, Ag = (A[:, 0 * ch:1 * ch], A[:, 1 * ch:2 * ch],
                      A[:, 2 * ch:3 * ch], A[:, 3 * ch:4 * ch])
    i = jax.nn.sigmoid(Ai)
    f = jax.nn.sigmoid(Af)
    o = jax.nn.sigmoid(Ao)
    g = jnp.tanh(Ag)
    c_new = c * f + i * g
    h_new = o * jnp.tanh(c_new)
    return h_new, c_new


if __name__ == "__main__":
    # CLSTMCell(input_channels=4, hidden_channels=8, kernel_size=3),
    # batch=2, spatial 16x16.
    N, Cin, Ch, H, W, K = 2, 4, 8, 16, 16, 3
    assert Ch % 2 == 0

    key = jax.random.PRNGKey(0)
    kx, kh, kc, kw, kb = jax.random.split(key, 5)

    x = jax.random.normal(kx, (N, Cin, H, W), jnp.float32)
    h = jax.random.normal(kh, (N, Ch, H, W), jnp.float32)
    c = jax.random.normal(kc, (N, Ch, H, W), jnp.float32)

    # nn.Conv2d(Cin+Ch, 4*Ch, K) shaped parameters.
    weight = 0.1 * jax.random.normal(kw, (4 * Ch, Cin + Ch, K, K), jnp.float32)
    bias = 0.1 * jax.random.normal(kb, (4 * Ch,), jnp.float32)

    h_new, c_new = clstm_cell(x, h, c, weight, bias, kernel_size=K)
    jax.block_until_ready((h_new, c_new))

    h_ref, c_ref = clstm_cell_reference(x, h, c, weight, bias)
    assert jnp.allclose(h_new, h_ref, atol=1e-4, rtol=1e-4), "h mismatch"
    assert jnp.allclose(c_new, c_ref, atol=1e-4, rtol=1e-4), "c mismatch"

    print("KERNEL_OK")
</pallas_src>

<mosaic_0001>
module attributes {stable_mosaic.version = 11 : i64} {
  func.func @_clstm_kernel(%arg0: i32, %arg1: memref<112x512xf32, #tpu.memory_space<vmem>>, %arg2: memref<32x112xf32, #tpu.memory_space<vmem>>, %arg3: memref<8x512xf32, #tpu.memory_space<vmem>>, %arg4: memref<8x512xf32, #tpu.memory_space<vmem>>, %arg5: memref<8x512xf32, #tpu.memory_space<vmem>>) attributes {dimension_semantics = [#tpu.dimension_semantics<arbitrary>], iteration_bounds = array<i64: 1>, scalar_prefetch = 0 : i64, scratch_operands = 0 : i64, tpu.core_type = #tpu.core_type<tc>, window_params = [{pipeline_mode = #tpu.pipeline_mode<synchronous>, transform_indices = @transform_0, window_bounds = array<i64: 112, 512>}, {pipeline_mode = #tpu.pipeline_mode<synchronous>, transform_indices = @transform_1, window_bounds = array<i64: 32, 112>}, {pipeline_mode = #tpu.pipeline_mode<synchronous>, transform_indices = @transform_2, window_bounds = array<i64: 8, 512>}, {pipeline_mode = #tpu.pipeline_mode<synchronous>, transform_indices = @transform_3, window_bounds = array<i64: 8, 512>}, {pipeline_mode = #tpu.pipeline_mode<synchronous>, transform_indices = @transform_4, window_bounds = array<i64: 8, 512>}]} {
    %c0 = arith.constant 0 : index
    %c0_0 = arith.constant 0 : index
    %0 = vector.load %arg2[%c0, %c0_0] : memref<32x112xf32, #tpu.memory_space<vmem>>, vector<32x112xf32>
    %c0_1 = arith.constant 0 : index
    %c0_2 = arith.constant 0 : index
    %1 = vector.load %arg1[%c0_1, %c0_2] : memref<112x512xf32, #tpu.memory_space<vmem>>, vector<112x512xf32>
    %cst = arith.constant dense<0.000000e+00> : vector<32x512xf32>
    %2 = tpu.matmul %0, %1, %cst {dimension_numbers = #tpu.dot_dimension_numbers<[1], [0], [0], [1], [0, 0, 1, 1], [], []>} : vector<32x112xf32>, vector<112x512xf32>, vector<32x512xf32> -> vector<32x512xf32>
    %3 = vector.extract_strided_slice %2 {offsets = [0, 0], sizes = [24, 512], strides = [1, 1]} : vector<32x512xf32> to vector<24x512xf32>
    %4 = arith.negf %3 : vector<24x512xf32>
    %5 = math.exp %4 : vector<24x512xf32>
    %cst_3 = arith.constant 1.000000e+00 : f32
    %6 = vector.broadcast %cst_3 : f32 to vector<24x512xf32>
    %7 = arith.addf %6, %5 : vector<24x512xf32>
    %8 = arith.divf %6, %7 : vector<24x512xf32>
    %9 = vector.extract_strided_slice %2 {offsets = [24, 0], sizes = [8, 512], strides = [1, 1]} : vector<32x512xf32> to vector<8x512xf32>
    %10 = math.tanh %9 : vector<8x512xf32>
    %11 = vector.extract_strided_slice %8 {offsets = [0, 0], sizes = [8, 512], strides = [1, 1]} : vector<24x512xf32> to vector<8x512xf32>
    %12 = vector.extract_strided_slice %8 {offsets = [8, 0], sizes = [8, 512], strides = [1, 1]} : vector<24x512xf32> to vector<8x512xf32>
    %13 = vector.extract_strided_slice %8 {offsets = [16, 0], sizes = [8, 512], strides = [1, 1]} : vector<24x512xf32> to vector<8x512xf32>
    %c0_4 = arith.constant 0 : index
    %c0_5 = arith.constant 0 : index
    %14 = vector.load %arg3[%c0_4, %c0_5] : memref<8x512xf32, #tpu.memory_space<vmem>>, vector<8x512xf32>
    %15 = arith.mulf %14, %12 : vector<8x512xf32>
    %16 = arith.mulf %11, %10 : vector<8x512xf32>
    %17 = arith.addf %15, %16 : vector<8x512xf32>
    %18 = math.tanh %17 : vector<8x512xf32>
    %19 = arith.mulf %13, %18 : vector<8x512xf32>
    %c0_6 = arith.constant 0 : index
    %c0_7 = arith.constant 0 : index
    %20 = vector.load %arg4[%c0_6, %c0_7] : memref<8x512xf32, #tpu.memory_space<vmem>>, vector<8x512xf32>
    tpu.vector_store %arg4[%c0_6, %c0_7], %19 {strides = array<i32>} : memref<8x512xf32, #tpu.memory_space<vmem>>, vector<8x512xf32>,
    %c0_8 = arith.constant 0 : index
    %c0_9 = arith.constant 0 : index
    %21 = vector.load %arg5[%c0_8, %c0_9] : memref<8x512xf32, #tpu.memory_space<vmem>>, vector<8x512xf32>
    tpu.vector_store %arg5[%c0_8, %c0_9], %17 {strides = array<i32>} : memref<8x512xf32, #tpu.memory_space<vmem>>, vector<8x512xf32>,
    return
  }
  func.func @transform_0(%arg0: i32) -> (i32, i32) {
    %c0_i32 = arith.constant 0 : i32
    %c0_i32_0 = arith.constant 0 : i32
    %c0_i32_1 = arith.constant 0 : i32
    return %c0_i32, %c0_i32_0 : i32, i32
  }
  func.func @transform_1(%arg0: i32) -> (i32, i32) {
    %c0_i32 = arith.constant 0 : i32
    %c0_i32_0 = arith.constant 0 : i32
    %c0_i32_1 = arith.constant 0 : i32
    return %c0_i32, %c0_i32_0 : i32, i32
  }
  func.func @transform_2(%arg0: i32) -> (i32, i32) {
    %c0_i32 = arith.constant 0 : i32
    %c0_i32_0 = arith.constant 0 : i32
    %c0_i32_1 = arith.constant 0 : i32
    return %c0_i32, %c0_i32_0 : i32, i32
  }
  func.func @transform_3(%arg0: i32) -> (i32, i32) {
    %c0_i32 = arith.constant 0 : i32
    %c0_i32_0 = arith.constant 0 : i32
    %c0_i32_1 = arith.constant 0 : i32
    return %c0_i32, %c0_i32_0 : i32, i32
  }
  func.func @transform_4(%arg0: i32) -> (i32, i32) {
    %c0_i32 = arith.constant 0 : i32
    %c0_i32_0 = arith.constant 0 : i32
    %c0_i32_1 = arith.constant 0 : i32
    return %c0_i32, %c0_i32_0 : i32, i32
  }
}

</mosaic_0001>

<llo_original>
// kernel: clstm_cell.1
$region0: #{clstm_cell.1}
  #allocation0 [shape = 'u32[]', space=smem, size = 0x4, offset = 0x4, fixed_abs, tag = 'smem constant byte address 0x4 - core index']
  #allocation1 [shape = 'u32[144,128]{1,0:T(1,128)}', space=vmem, size = 0x12000, scoped, tag = 'internal scratch']
  %s0 = inlined_call_operand.vmem [shape: f32[112,512], index: 0, kind: input, shape index: {}]
  %s1 = inlined_call_operand.vmem [shape: f32[32,112], index: 1, kind: input, shape index: {}]
  %s2 = inlined_call_operand.vmem [shape: f32[8,512], index: 2, kind: input, shape index: {}, may-alias: {2,4}]
  %s3 = inlined_call_operand.vmem [shape: f32[8,512], index: 3, kind: output, shape index: {0}]
  %s4 = inlined_call_operand.vmem [shape: f32[8,512], index: 4, kind: output, shape index: {1}, may-alias: {2,4}]
  %5 = xla_tuple %s3, %s4
  %s6 = sld [smem:[#allocation0]]
  $region30: #{clstm_cell.1} parent=0
    _
  %s8 = ssub.s32 1, %s6
  %s9 = scalar_select 0, %s8, %s6
  // Predicated region
  $region2: #{clstm_cell.1} parent=0 // pred_check
    _
  $region3: #{clstm_cell.1} parent=0 // pred_check_branch
    %11 = sbr.rel (0) target = $region5
  $region4: #{clstm_cell.1} parent=0 // pred_region
    _
  $region5: #{clstm_cell.1} parent=0 // pred_fallthru
    _
  // Predicated region
  $region6: #{clstm_cell.1} parent=0 // pred_check
    _
  $region7: #{clstm_cell.1} parent=0 // pred_check_branch
    %13 = sbr.rel (0) target = $region9
  $region8: #{clstm_cell.1} parent=0 // pred_region
    _
  $region9: #{clstm_cell.1} parent=0 // pred_fallthru
    _
  // Predicated region
  $region10: #{clstm_cell.1} parent=0 // pred_check
    _
  $region11: #{clstm_cell.1} parent=0 // pred_check_branch
    %15 = sbr.rel (0) target = $region13
  $region12: #{clstm_cell.1} parent=0 // pred_region
    _
  $region13: #{clstm_cell.1} parent=0 // pred_fallthru
    _
  %v16 = vld [vmem:[%s1] sm:$0xff]
  %v17 = vld [vmem:[%s1 + $0x8] sm:$0xff]
  %v18 = vld [vmem:[%s1 + $0x10] sm:$0xff]
  %v19 = vld [vmem:[%s1 + $0x18] sm:$0xff]
  %v20 = vld [vmem:[%s0] sm:$0xff]
  %v21 = vld [vmem:[%s0 + $0x8] sm:$0xff]
  %v22 = vld [vmem:[%s0 + $0x10] sm:$0xff]
  %v23 = vld [vmem:[%s0 + $0x18] sm:$0xff]
  %v24 = vld [vmem:[%s0 + $0x20] sm:$0xff]
  %v25 = vld [vmem:[%s0 + $0x28] sm:$0xff]
  %v26 = vld [vmem:[%s0 + $0x30] sm:$0xff]
  %v27 = vld [vmem:[%s0 + $0x38] sm:$0xff]
  %v28 = vld [vmem:[%s0 + $0x40] sm:$0xff]
  %v29 = vld [vmem:[%s0 + $0x48] sm:$0xff]
  %v30 = vld [vmem:[%s0 + $0x50] sm:$0xff]
  %v31 = vld [vmem:[%s0 + $0x58] sm:$0xff]
  %v32 = vld [vmem:[%s0 + $0x60] sm:$0xff]
  %v33 = vld [vmem:[%s0 + $0x68] sm:$0xff]
  %v34 = vld [vmem:[%s0 + $0x70] sm:$0xff]
  %v35 = vld [vmem:[%s0 + $0x78] sm:$0xff]
  %v36 = vld [vmem:[%s0 + $0x80] sm:$0xff]
  %v37 = vld [vmem:[%s0 + $0x88] sm:$0xff]
  %v38 = vld [vmem:[%s0 + $0x90] sm:$0xff]
  %v39 = vld [vmem:[%s0 + $0x98] sm:$0xff]
  %v40 = vld [vmem:[%s0 + $0xa0] sm:$0xff]
  %v41 = vld [vmem:[%s0 + $0xa8] sm:$0xff]
  %v42 = vld [vmem:[%s0 + $0xb0] sm:$0xff]
  %v43 = vld [vmem:[%s0 + $0xb8] sm:$0xff]
  %v44 = vld [vmem:[%s0 + $0xc0] sm:$0xff]
  %v45 = vld [vmem:[%s0 + $0xc8] sm:$0xff]
  %v46 = vld [vmem:[%s0 + $0xd0] sm:$0xff]
  %v47 = vld [vmem:[%s0 + $0xd8] sm:$0xff]
  %v48 = vld [vmem:[%s0 + $0xe0] sm:$0xff]
  %v49 = vld [vmem:[%s0 + $0xe8] sm:$0xff]
  %v50 = vld [vmem:[%s0 + $0xf0] sm:$0xff]
  %v51 = vld [vmem:[%s0 + $0xf8] sm:$0xff]
  %v52 = vld [vmem:[%s0 + $0x100] sm:$0xff]
  %v53 = vld [vmem:[%s0 + $0x108] sm:$0xff]
  %v54 = vld [vmem:[%s0 + $0x110] sm:$0xff]
  %v55 = vld [vmem:[%s0 + $0x118] sm:$0xff]
  %v56 = vld [vmem:[%s0 + $0x120] sm:$0xff]
  %v57 = vld [vmem:[%s0 + $0x128] sm:$0xff]
  %v58 = vld [vmem:[%s0 + $0x130] sm:$0xff]
  %v59 = vld [vmem:[%s0 + $0x138] sm:$0xff]
  %v60 = vld [vmem:[%s0 + $0x140] sm:$0xff]
  %v61 = vld [vmem:[%s0 + $0x148] sm:$0xff]
  %v62 = vld [vmem:[%s0 + $0x150] sm:$0xff]
  %v63 = vld [vmem:[%s0 + $0x158] sm:$0xff]
  %v64 = vld [vmem:[%s0 + $0x160] sm:$0xff]
  %v65 = vld [vmem:[%s0 + $0x168] sm:$0xff]
  %v66 = vld [vmem:[%s0 + $0x170] sm:$0xff]
  %v67 = vld [vmem:[%s0 + $0x178] sm:$0xff]
  %v68 = vld [vmem:[%s0 + $0x180] sm:$0xff]
  %v69 = vld [vmem:[%s0 + $0x188] sm:$0xff]
  %v70 = vld [vmem:[%s0 + $0x190] sm:$0xff]
  %v71 = vld [vmem:[%s0 + $0x198] sm:$0xff]
  %v72 = vld [vmem:[%s0 + $0x1a0] sm:$0xff]
  %v73 = vld [vmem:[%s0 + $0x1a8] sm:$0xff]
  %v74 = vld [vmem:[%s0 + $0x1b0] sm:$0xff]
  %v75 = vld [vmem:[%s0 + $0x1b8] sm:$0xff]
  %vm76 = vcmask 916480
  %v78 = vsel %vm76, %v16, 0
  %v81 = vsel %vm76, %v17, 0
  %v84 = vsel %vm76, %v18, 0
  %v87 = vsel %vm76, %v19, 0
  %89 = vmatprep.subr.mxu0 0.0
  %90 = vmatpush1.msra.mxu0 0.0
  %91 = vmatprep.subr.mxu0 0.0
  %92 = vmatpush1.msra.mxu0 0.0
  %93 = vmatprep.subr.mxu0 %v73
  %94 = vmatpush1.msra.mxu0 %v72
  %95 = vmatprep.subr.mxu0 %v69
  %96 = vmatpush1.msra.mxu0 %v68
  %97 = vmatprep.subr.mxu0 %v65
  %98 = vmatpush1.msra.mxu0 %v64
  %99 = vmatprep.subr.mxu0 %v61
  %100 = vmatpush1.msra.mxu0 %v60
  %101 = vmatprep.subr.mxu0 %v57
  %102 = vmatpush1.msra.mxu0 %v56
  %103 = vmatprep.subr.mxu0 %v53
  %104 = vmatpush1.msra.mxu0 %v52
  %105 = vmatprep.subr.mxu0 %v49
  %106 = vmatpush1.msra.mxu0 %v48
  %107 = vmatprep.subr.mxu0 %v45
  %108 = vmatpush1.msra.mxu0 %v44
  %109 = vmatprep.subr.mxu0 %v41
  %110 = vmatpush1.msra.mxu0 %v40
  %111 = vmatprep.subr.mxu0 %v37
  %112 = vmatpush1.msra.mxu0 %v36
  %113 = vmatprep.subr.mxu0 %v33
  %114 = vmatpush1.msra.mxu0 %v32
  %115 = vmatprep.subr.mxu0 %v29
  %116 = vmatpush1.msra.mxu0 %v28
  %117 = vmatprep.subr.mxu0 %v25
  %118 = vmatpush1.msra.mxu0 %v24
  %119 = vmatprep.subr.mxu0 %v21
  %120 = vmatpush1.msra.mxu0 %v20
  %121 = vmatprep.subr.mxu0 0.0
  %122 = vmatpush2.msra.mxu0 0.0
  %123 = vmatprep.subr.mxu0 0.0
  %124 = vmatpush2.msra.mxu0 0.0
  %125 = vmatprep.subr.mxu0 0.0
  %126 = vmatpush2.msra.mxu0 0.0
  %127 = vmatprep.subr.mxu0 0.0
  %128 = vmatpush2.msra.mxu0 0.0
  %129 = vmatprep.subr.mxu0 0.0
  %130 = vmatpush2.msra.mxu0 0.0
  %131 = vmatprep.subr.mxu0 0.0
  %132 = vmatpush2.msra.mxu0 0.0
  %133 = vmatprep.subr.mxu0 0.0
  %134 = vmatpush2.msra.mxu0 0.0
  %135 = vmatprep.subr.mxu0 0.0
  %136 = vmatpush2.msra.mxu0 0.0
  %137 = vmatprep.subr.mxu0 0.0
  %138 = vmatpush2.msra.mxu0 0.0
  %139 = vmatprep.subr.mxu0 0.0
  %140 = vmatpush2.msra.mxu0 0.0
  %141 = vmatprep.subr.mxu0 0.0
  %142 = vmatpush2.msra.mxu0 0.0
  %143 = vmatprep.subr.mxu0 0.0
  %144 = vmatpush2.msra.mxu0 0.0
  %145 = vmatprep.subr.mxu0 0.0
  %146 = vmatpush2.msra.mxu0 0.0
  %147 = vmatprep.subr.mxu0 0.0
  %148 = vmatpush2.msra.mxu0 0.0
  %149 = vmatprep.subr.mxu0 0.0
  %150 = vmatpush2.msra.mxu0 0.0
  %151 = vmatprep.subr.mxu0 0.0
  %152 = vmatpush2.msra.mxu0 0.0
  %153 = vmatprep.mubr.f32.mxu0 0.0
  %154 = vmatmul.mubr.f32.gmra.mxu0 %v78
  %v155 = vpop.f32.mrf.mxu0
  %v156 = vadd.f32 0.0, %v155
  %v157 = vpop.f32.mrf.mxu0
  %v158 = vadd.f32 0.0, %v157
  %159 = vmatprep.mubr.f32.mxu0 0.0
  %160 = vmatmul.mubr.f32.gmra.mxu0 %v81
  %v161 = vpop.f32.mrf.mxu0
  %v162 = vadd.f32 0.0, %v161
  %v163 = vpop.f32.mrf.mxu0
  %v164 = vadd.f32 0.0, %v163
  %165 = vmatprep.mubr.f32.mxu0 0.0
  %166 = vmatmul.mubr.f32.gmra.mxu0 %v84
  %v167 = vpop.f32.mrf.mxu0
  %v168 = vadd.f32 0.0, %v167
  %v169 = vpop.f32.mrf.mxu0
  %v170 = vadd.f32 0.0, %v169
  %171 = vmatprep.mubr.f32.mxu0 0.0
  %172 = vmatmul.mubr.f32.gmra.mxu0 %v87
  %v173 = vpop.f32.mrf.mxu0
  %v174 = vadd.f32 0.0, %v173
  %v175 = vpop.f32.mrf.mxu0
  %v176 = vadd.f32 0.0, %v175
  %177 = vdwg.mxu0
  %178 = vmatprep.subr.mxu0 0.0
  %179 = vmatpush1.msra.mxu0 0.0
  %180 = vmatprep.subr.mxu0 0.0
  %181 = vmatpush1.msra.mxu0 0.0
  %182 = vmatprep.subr.mxu0 %v75
  %183 = vmatpush1.msra.mxu0 %v74
  %184 = vmatprep.subr.mxu0 %v71
  %185 = vmatpush1.msra.mxu0 %v70
  %186 = vmatprep.subr.mxu0 %v67
  %187 = vmatpush1.msra.mxu0 %v66
  %188 = vmatprep.subr.mxu0 %v63
  %189 = vmatpush1.msra.mxu0 %v62
  %190 = vmatprep.subr.mxu0 %v59
  %191 = vmatpush1.msra.mxu0 %v58
  %192 = vmatprep.subr.mxu0 %v55
  %193 = vmatpush1.msra.mxu0 %v54
  %194 = vmatprep.subr.mxu0 %v51
  %195 = vmatpush1.msra.mxu0 %v50
  %196 = vmatprep.subr.mxu0 %v47
  %197 = vmatpush1.msra.mxu0 %v46
  %198 = vmatprep.subr.mxu0 %v43
  %199 = vmatpush1.msra.mxu0 %v42
  %200 = vmatprep.subr.mxu0 %v39
  %201 = vmatpush1.msra.mxu0 %v38
  %202 = vmatprep.subr.mxu0 %v35
  %203 = vmatpush1.msra.mxu0 %v34
  %204 = vmatprep.subr.mxu0 %v31
  %205 = vmatpush1.msra.mxu0 %v30
  %206 = vmatprep.subr.mxu0 %v27
  %207 = vmatpush1.msra.mxu0 %v26
  %208 = vmatprep.subr.mxu0 %v23
  %209 = vmatpush1.msra.mxu0 %v22
  %210 = vmatprep.subr.mxu0 0.0
  %211 = vmatpush2.msra.mxu0 0.0
  %212 = vmatprep.subr.mxu0 0.0
  %213 = vmatpush2.msra.mxu0 0.0
  %214 = vmatprep.subr.mxu0 0.0
  %215 = vmatpush2.msra.mxu0 0.0
  %216 = vmatprep.subr.mxu0 0.0
  %217 = vmatpush2.msra.mxu0 0.0
  %218 = vmatprep.subr.mxu0 0.0
  %219 = vmatpush2.msra.mxu0 0.0
  %220 = vmatprep.subr.mxu0 0.0
  %221 = vmatpush2.msra.mxu0 0.0
  %222 = vmatprep.subr.mxu0 0.0
  %223 = vmatpush2.msra.mxu0 0.0
  %224 = vmatprep.subr.mxu0 0.0
  %225 = vmatpush2.msra.mxu0 0.0
  %226 = vmatprep.subr.mxu0 0.0
  %227 = vmatpush2.msra.mxu0 0.0
  %228 = vmatprep.subr.mxu0 0.0
  %229 = vmatpush2.msra.mxu0 0.0
  %230 = vmatprep.subr.mxu0 0.0
  %231 = vmatpush2.msra.mxu0 0.0
  %232 = vmatprep.subr.mxu0 0.0
  %233 = vmatpush2.msra.mxu0 0.0
  %234 = vmatprep.subr.mxu0 0.0
  %235 = vmatpush2.msra.mxu0 0.0
  %236 = vmatprep.subr.mxu0 0.0
  %237 = vmatpush2.msra.mxu0 0.0
  %238 = vmatprep.subr.mxu0 0.0
  %239 = vmatpush2.msra.mxu0 0.0
  %240 = vmatprep.subr.mxu0 0.0
  %241 = vmatpush2.msra.mxu0 0.0
  %242 = vmatprep.mubr.f32.mxu0 0.0
  %243 = vmatmul.mubr.f32.gmra.mxu0 %v78
  %v244 = vpop.f32.mrf.mxu0
  %v245 = vadd.f32 0.0, %v244
  %v246 = vpop.f32.mrf.mxu0
  %v247 = vadd.f32 0.0, %v246
  %248 = vmatprep.mubr.f32.mxu0 0.0
  %249 = vmatmul.mubr.f32.gmra.mxu0 %v81
  %v250 = vpop.f32.mrf.mxu0
  %v251 = vadd.f32 0.0, %v250
  %v252 = vpop.f32.mrf.mxu0
  %v253 = vadd.f32 0.0, %v252
  %254 = vmatprep.mubr.f32.mxu0 0.0
  %255 = vmatmul.mubr.f32.gmra.mxu0 %v84
  %v256 = vpop.f32.mrf.mxu0
  %v257 = vadd.f32 0.0, %v256
  %v258 = vpop.f32.mrf.mxu0
  %v259 = vadd.f32 0.0, %v258
  %260 = vmatprep.mubr.f32.mxu0 0.0
  %261 = vmatmul.mubr.f32.gmra.mxu0 %v87
  %v262 = vpop.f32.mrf.mxu0
  %v263 = vadd.f32 0.0, %v262
  %v264 = vpop.f32.mrf.mxu0
  %v265 = vadd.f32 0.0, %v264
  %266 = vdwg.mxu0
  %v267 = vxor.u32 %v156, 2147483648
  %v268 = vxor.u32 %v158, 2147483648
  %v269 = vxor.u32 %v245, 2147483648
  %v270 = vxor.u32 %v247, 2147483648
  %v271 = vxor.u32 %v162, 2147483648
  %v272 = vxor.u32 %v164, 2147483648
  %v273 = vxor.u32 %v251, 2147483648
  %v274 = vxor.u32 %v253, 2147483648
  %v275 = vxor.u32 %v168, 2147483648
  %v276 = vxor.u32 %v170, 2147483648
  %v277 = vxor.u32 %v257, 2147483648
  %v278 = vxor.u32 %v259, 2147483648
  %v279 = vmul.f32 %v267, 1.442695
  %v280 = vpow.pop %v279
  %v281 = vmul.f32 %v268, 1.442695
  %v282 = vpow.pop %v281
  %v283 = vmul.f32 %v269, 1.442695
  %v284 = vpow.pop %v283
  %v285 = vmul.f32 %v270, 1.442695
  %v286 = vpow.pop %v285
  %v287 = vmul.f32 %v271, 1.442695
  %v288 = vpow.pop %v287
  %v289 = vmul.f32 %v272, 1.442695
  %v290 = vpow.pop %v289
  %v291 = vmul.f32 %v273, 1.442695
  %v292 = vpow.pop %v291
  %v293 = vmul.f32 %v274, 1.442695
  %v294 = vpow.pop %v293
  %v295 = vmul.f32 %v275, 1.442695
  %v296 = vpow.pop %v295
  %v297 = vmul.f32 %v276, 1.442695
  %v298 = vpow.pop %v297
  %v299 = vmul.f32 %v277, 1.442695
  %v300 = vpow.pop %v299
  %v301 = vmul.f32 %v278, 1.442695
  %v302 = vpow.pop %v301
  %v303 = vadd.f32 %v280, 1.0
  %v304 = vadd.f32 %v282, 1.0
  %v305 = vadd.f32 %v284, 1.0
  %v306 = vadd.f32 %v286, 1.0
  %v307 = vadd.f32 %v288, 1.0
  %v308 = vadd.f32 %v290, 1.0
  %v309 = vadd.f32 %v292, 1.0
  %v310 = vadd.f32 %v294, 1.0
  %v311 = vadd.f32 %v296, 1.0
  %v312 = vadd.f32 %v298, 1.0
  %v313 = vadd.f32 %v300, 1.0
  %v314 = vadd.f32 %v302, 1.0
  %v315 = vrcp.pop %v303
  %v316 = vmul.f32 1.0, %v315
  %v317 = vrcp.pop %v304
  %v318 = vmul.f32 1.0, %v317
  %v319 = vrcp.pop %v305
  %v320 = vmul.f32 1.0, %v319
  %v321 = vrcp.pop %v306
  %v322 = vmul.f32 1.0, %v321
  %v323 = vrcp.pop %v307
  %v324 = vmul.f32 1.0, %v323
  %v325 = vrcp.pop %v308
  %v326 = vmul.f32 1.0, %v325
  %v327 = vrcp.pop %v309
  %v328 = vmul.f32 1.0, %v327
  %v329 = vrcp.pop %v310
  %v330 = vmul.f32 1.0, %v329
  %v331 = vrcp.pop %v311
  %v332 = vmul.f32 1.0, %v331
  %v333 = vrcp.pop %v312
  %v334 = vmul.f32 1.0, %v333
  %v335 = vrcp.pop %v313
  %v336 = vmul.f32 1.0, %v335
  %v337 = vrcp.pop %v314
  %v338 = vmul.f32 1.0, %v337
  %v339 = vtanh.pop %v174
  %v340 = vtanh.pop %v176
  %v341 = vtanh.pop %v263
  %v342 = vtanh.pop %v265
  %v343 = vld [vmem:[%s2] sm:$0xff]
  %v344 = vld [vmem:[%s2 + $0x8] sm:$0xff]
  %v345 = vld [vmem:[%s2 + $0x10] sm:$0xff]
  %v346 = vld [vmem:[%s2 + $0x18] sm:$0xff]
  %v347 = vmul.f32 %v343, %v324
  %v348 = vmul.f32 %v344, %v326
  %v349 = vmul.f32 %v345, %v328
  %v350 = vmul.f32 %v346, %v330
  %v351 = vmul.f32 %v316, %v339
  %v352 = vmul.f32 %v318, %v340
  %v353 = vmul.f32 %v320, %v341
  %v354 = vmul.f32 %v322, %v342
  %v355 = vadd.f32 %v347, %v351
  %v356 = vadd.f32 %v348, %v352
  %v357 = vadd.f32 %v349, %v353
  %v358 = vadd.f32 %v350, %v354
  %v359 = vtanh.pop %v355
  %v360 = vtanh.pop %v356
  %v361 = vtanh.pop %v357
  %v362 = vtanh.pop %v358
  %v363 = vmul.f32 %v332, %v359
  %v364 = vmul.f32 %v334, %v360
  %v365 = vmul.f32 %v336, %v361
  %v366 = vmul.f32 %v338, %v362
  %367 = vst [vmem:[%s3] sm:$0xff] %v363
  %368 = vst [vmem:[%s3 + $0x8] sm:$0xff] %v364
  %369 = vst [vmem:[%s3 + $0x10] sm:$0xff] %v365
  %370 = vst [vmem:[%s3 + $0x18] sm:$0xff] %v366
  %371 = vst [vmem:[%s4] sm:$0xff] %v355
  %372 = vst [vmem:[%s4 + $0x8] sm:$0xff] %v356
  %373 = vst [vmem:[%s4 + $0x10] sm:$0xff] %v357
  %374 = vst [vmem:[%s4 + $0x18] sm:$0xff] %v358
  // Predicated region
  $region14: #{clstm_cell.1} parent=0 // pred_check
    _
  $region15: #{clstm_cell.1} parent=0 // pred_check_branch
    %376 = sbr.rel (0) target = $region17
  $region16: #{clstm_cell.1} parent=0 // pred_region
    _
  $region17: #{clstm_cell.1} parent=0 // pred_fallthru
    _
  // Predicated region
  $region18: #{clstm_cell.1} parent=0 // pred_check
    _
  $region19: #{clstm_cell.1} parent=0 // pred_check_branch
    %378 = sbr.rel (0) target = $region21
  $region20: #{clstm_cell.1} parent=0 // pred_region
    _
  $region21: #{clstm_cell.1} parent=0 // pred_fallthru
    _
  // Predicated region
  $region22: #{clstm_cell.1} parent=0 // pred_check
    _
  $region23: #{clstm_cell.1} parent=0 // pred_check_branch
    %380 = sbr.rel (0) target = $region25
  $region24: #{clstm_cell.1} parent=0 // pred_region
    _
  $region25: #{clstm_cell.1} parent=0 // pred_fallthru
    _
  // Predicated region
  $region26: #{clstm_cell.1} parent=0 // pred_check
    _
  $region27: #{clstm_cell.1} parent=0 // pred_check_branch
    %382 = sbr.rel (0) target = $region29
  $region28: #{clstm_cell.1} parent=0 // pred_region
    _
  $region29: #{clstm_cell.1} parent=0 // pred_fallthru
    _

</llo_original>
